<compile_context>
chip_gen: v6e
topology: v6e:2x2x1
jax: 0.10.0
libtpu: 0.0.40
codegen_flags: <defaults>
</compile_context>

<pallas_src>
import jax
import jax.numpy as jnp
from jax import lax
from jax.experimental import pallas as pl
from jax.experimental.pallas import tpu as pltpu


def _bilstm_cls_kernel(emb2_ref, wih_ref, b_ref, whh_ref, wfc_ref, bfc_ref, out_ref):
    """Packed bidirectional LSTM recurrence + FC + sigmoid, fully in VMEM/vregs.

    emb2_ref: (S, 2E)      [emb[t], emb[S-1-t]] per row
    wih_ref : (2E, 8H)     packed input->gate weights (blocks [i_f,i_b,f_f,f_b,g_f,g_b,o_f,o_b])
    b_ref   : (1, 8H)      packed biases (b_ih + b_hh per direction)
    whh_ref : (2H, 8H)     block-diagonal recurrent weights (rows 0..H: h_f, rows H..2H: h_b)
    wfc_ref : (2H, OPAD)   fc weight, zero-padded to 128 lanes
    bfc_ref : (1, OPAD)
    out_ref : (SPAD, OPAD) sigmoid(fc(lstm_out[:, -1, :])), padded rows/lanes hold sigmoid(0)=0.5
    """
    S = emb2_ref.shape[0]
    SPAD = out_ref.shape[0]
    H2 = whh_ref.shape[0]          # 2H
    H = H2 // 2

    # Input projection for every timestep of BOTH directions, hoisted off the serial chain.
    gx_all = jnp.dot(emb2_ref[...], wih_ref[...],
                     preferred_element_type=jnp.float32) + b_ref[...]      # (S, 8H)

    whh = whh_ref[...]                                                     # (2H, 8H)

    h = jnp.zeros((1, H2), jnp.float32)    # [h_fwd, h_bwd] carried in registers
    c = jnp.zeros((1, H2), jnp.float32)    # [c_fwd, c_bwd]
    hs = []
    # Fully-unrolled serial recurrence: each step = one small MXU dot + a few EUP/VPU ops.
    for t in range(S):
        gates = gx_all[t:t + 1, :] + jnp.dot(h, whh,
                                             preferred_element_type=jnp.float32)  # (1, 8H)
        sg = jax.nn.sigmoid(gates)              # one pass over the whole gate row
        i = sg[:, 0 * H2:1 * H2]
        f = sg[:, 1 * H2:2 * H2]
        g = jnp.tanh(gates[:, 2 * H2:3 * H2])
        o = sg[:, 3 * H2:4 * H2]
        c = f * c + i * g
        h = o * jnp.tanh(c)
        hs.append(h)                            # (1, 2H): [h_f at step t, h_b at step t]

    # lstm_out[:, -1, :][t] = [forward hidden at time t, backward hidden at time t]
    #   forward hidden at time t  = packed step t
    #   backward hidden at time t = packed step S-1-t
    sel_rows = []
    for t in range(S):
        sel_rows.append(jnp.concatenate([hs[t][:, :H], hs[S - 1 - t][:, H:]], axis=1))
    if SPAD > S:  # pad rows so the final store is a full, unmasked (8,128) tile
        sel_rows.append(jnp.zeros((SPAD - S, H2), jnp.float32))
    sel = jnp.concatenate(sel_rows, axis=0)                                # (SPAD, 2H)

    logits = jnp.dot(sel, wfc_ref[...], preferred_element_type=jnp.float32) + bfc_ref[...]
    out_ref[...] = jax.nn.sigmoid(logits)


@jax.jit
def classification_forward(x, params):
    emb_tbl = params["embedding"]                 # (V, E)
    E = emb_tbl.shape[1]
    H = params["w_hh_f"].shape[1]
    O = params["w_fc"].shape[0]
    S = x.shape[0]
    OPAD = max(128, ((O + 127) // 128) * 128)     # lane-dense output width
    SPAD = max(8, ((S + 7) // 8) * 8)             # sublane-dense output height

    # Only batch element N-1 matters for lstm_out[:, -1, :]; drop the rest up front.
    idx = x[:, -1]                                                  # (S,)
    emb = jnp.take(emb_tbl, idx, axis=0)                            # (S, E)
    emb2 = jnp.concatenate([emb, emb[::-1]], axis=1)                # (S, 2E)

    def interleave_gates(m_f, m_b):
        # m_f/m_b: (rows, 4H) in torch gate order [i, f, g, o]  ->
        # (rows, 8H) with per-gate direction interleave [i_f,i_b,f_f,f_b,g_f,g_b,o_f,o_b]
        blocks = []
        for k in range(4):
            blocks.append(m_f[:, k * H:(k + 1) * H])
            blocks.append(m_b[:, k * H:(k + 1) * H])
        return jnp.concatenate(blocks, axis=1)

    zE = jnp.zeros((E, 4 * H), jnp.float32)
    zH = jnp.zeros((H, 4 * H), jnp.float32)
    # Input weights: rows 0..E act on emb[t] (forward dir), rows E..2E on emb[S-1-t] (backward).
    wih = interleave_gates(jnp.concatenate([params["w_ih_f"].T, zE], axis=0),
                           jnp.concatenate([zE, params["w_ih_b"].T], axis=0))   # (2E, 8H)
    # Recurrent weights: block-diagonal (rows 0..H: h_f, rows H..2H: h_b).
    whh = interleave_gates(jnp.concatenate([params["w_hh_f"].T, zH], axis=0),
                           jnp.concatenate([zH, params["w_hh_b"].T], axis=0))   # (2H, 8H)
    b_f = (params["b_ih_f"] + params["b_hh_f"]).reshape(1, 4 * H)
    b_b = (params["b_ih_b"] + params["b_hh_b"]).reshape(1, 4 * H)
    b = interleave_gates(b_f, b_b)                                              # (1, 8H)

    # FC weight/bias zero-padded to a full 128-lane output width (lane-dense stores).
    wfc = jnp.zeros((2 * H, OPAD), jnp.float32).at[:, :O].set(params["w_fc"].T)
    bfc = jnp.zeros((1, OPAD), jnp.float32).at[:, :O].set(params["b_fc"])

    vmem = pl.BlockSpec(memory_space=pltpu.MemorySpace.VMEM)
    out = pl.pallas_call(
        _bilstm_cls_kernel,
        out_shape=jax.ShapeDtypeStruct((SPAD, OPAD), jnp.float32),
        in_specs=[vmem] * 6,
        out_specs=vmem,
    )(emb2, wih, b, whh, wfc, bfc)
    return out[:S, :O]


def make_params(key, vocab_size, E, H, O):
    ks = jax.random.split(key, 11)

    def u(k, shape, bound):
        return jax.random.uniform(k, shape, jnp.float32, -bound, bound)

    kl = 1.0 / float(jnp.sqrt(H))
    kf = 1.0 / float(jnp.sqrt(2 * H))
    return dict(
        embedding=jax.random.normal(ks[0], (vocab_size, E), jnp.float32),
        w_ih_f=u(ks[1], (4 * H, E), kl), w_hh_f=u(ks[2], (4 * H, H), kl),
        b_ih_f=u(ks[3], (4 * H,), kl), b_hh_f=u(ks[4], (4 * H,), kl),
        w_ih_b=u(ks[5], (4 * H, E), kl), w_hh_b=u(ks[6], (4 * H, H), kl),
        b_ih_b=u(ks[7], (4 * H,), kl), b_hh_b=u(ks[8], (4 * H,), kl),
        w_fc=u(ks[9], (O, 2 * H), kf), b_fc=u(ks[10], (O,), kf),
    )


def reference_forward(x, params):
    """Pure-JAX reference mirroring the PyTorch forward semantics (full batch)."""
    emb = jnp.take(params["embedding"], x, axis=0)                    # (S, N, E)
    S, N, _ = emb.shape
    H = params["w_hh_f"].shape[1]

    def run(w_ih, w_hh, b_ih, b_hh, seq):
        def step(carry, x_t):
            h, c = carry
            gates = x_t @ w_ih.T + b_ih + h @ w_hh.T + b_hh
            i, f, g, o = jnp.split(gates, 4, axis=-1)
            c = jax.nn.sigmoid(f) * c + jax.nn.sigmoid(i) * jnp.tanh(g)
            h = jax.nn.sigmoid(o) * jnp.tanh(c)
            return (h, c), h
        init = (jnp.zeros((N, H), jnp.float32), jnp.zeros((N, H), jnp.float32))
        _, hs = lax.scan(step, init, seq)
        return hs

    hs_f = run(params["w_ih_f"], params["w_hh_f"], params["b_ih_f"],
               params["b_hh_f"], emb)
    hs_b = run(params["w_ih_b"], params["w_hh_b"], params["b_ih_b"],
               params["b_hh_b"], emb[::-1])[::-1]
    lstm_out = jnp.concatenate([hs_f, hs_b], axis=-1)                 # (S, N, 2H)
    final = lstm_out[:, -1, :]                                        # (S, 2H)
    return jax.nn.sigmoid(final @ params["w_fc"].T + params["b_fc"])


if __name__ == "__main__":
    vocab_size, embedding_dim, hidden_dim, output_dim = 50, 16, 32, 4
    S, N = 6, 8   # x: dim0 = LSTM time axis, dim1 = LSTM batch axis (batch_first=False)

    key = jax.random.PRNGKey(0)
    kp, kx = jax.random.split(key)
    params = make_params(kp, vocab_size, embedding_dim, hidden_dim, output_dim)
    x = jax.random.randint(kx, (S, N), 0, vocab_size, dtype=jnp.int32)

    out = classification_forward(x, params)
    out = jax.block_until_ready(out)

    ref = reference_forward(x, params)
    assert out.shape == (S, output_dim), out.shape
    assert jnp.allclose(out, ref, atol=1e-5, rtol=1e-5), float(jnp.max(jnp.abs(out - ref)))

    print("KERNEL_OK")
</pallas_src>

<mosaic_0001>
module attributes {stable_mosaic.version = 11 : i64} {
  func.func @_bilstm_cls_kernel(%arg0: memref<6x32xf32, #tpu.memory_space<vmem>>, %arg1: memref<32x256xf32, #tpu.memory_space<vmem>>, %arg2: memref<1x256xf32, #tpu.memory_space<vmem>>, %arg3: memref<64x256xf32, #tpu.memory_space<vmem>>, %arg4: memref<64x128xf32, #tpu.memory_space<vmem>>, %arg5: memref<1x128xf32, #tpu.memory_space<vmem>>, %arg6: memref<8x128xf32, #tpu.memory_space<vmem>>) attributes {dimension_semantics = [], scalar_prefetch = 0 : i64, scratch_operands = 0 : i64, tpu.core_type = #tpu.core_type<tc>} {
    %c0 = arith.constant 0 : index
    %c0_0 = arith.constant 0 : index
    %0 = vector.load %arg0[%c0, %c0_0] : memref<6x32xf32, #tpu.memory_space<vmem>>, vector<6x32xf32>
    %c0_1 = arith.constant 0 : index
    %c0_2 = arith.constant 0 : index
    %1 = vector.load %arg1[%c0_1, %c0_2] : memref<32x256xf32, #tpu.memory_space<vmem>>, vector<32x256xf32>
    %cst = arith.constant dense<0.000000e+00> : vector<6x256xf32>
    %2 = tpu.matmul %0, %1, %cst {dimension_numbers = #tpu.dot_dimension_numbers<[1], [0], [0], [1], [0, 0, 1, 1], [], []>} : vector<6x32xf32>, vector<32x256xf32>, vector<6x256xf32> -> vector<6x256xf32>
    %c0_3 = arith.constant 0 : index
    %c0_4 = arith.constant 0 : index
    %3 = vector.load %arg2[%c0_3, %c0_4] : memref<1x256xf32, #tpu.memory_space<vmem>>, vector<1x256xf32>
    %4 = vector.broadcast %3 : vector<1x256xf32> to vector<6x256xf32>
    %5 = arith.addf %2, %4 : vector<6x256xf32>
    %c0_5 = arith.constant 0 : index
    %c0_6 = arith.constant 0 : index
    %6 = vector.load %arg3[%c0_5, %c0_6] : memref<64x256xf32, #tpu.memory_space<vmem>>, vector<64x256xf32>
    %cst_7 = arith.constant 0.000000e+00 : f32
    %7 = vector.broadcast %cst_7 : f32 to vector<1x64xf32>
    %cst_8 = arith.constant 0.000000e+00 : f32
    %8 = vector.broadcast %cst_8 : f32 to vector<1x64xf32>
    %9 = vector.extract_strided_slice %5 {offsets = [0, 0], sizes = [1, 256], strides = [1, 1]} : vector<6x256xf32> to vector<1x256xf32>
    %cst_9 = arith.constant dense<0.000000e+00> : vector<1x256xf32>
    %10 = tpu.matmul %7, %6, %cst_9 {dimension_numbers = #tpu.dot_dimension_numbers<[1], [0], [0], [1], [0, 0, 1, 1], [], []>} : vector<1x64xf32>, vector<64x256xf32>, vector<1x256xf32> -> vector<1x256xf32>
    %11 = arith.addf %9, %10 : vector<1x256xf32>
    %12 = arith.negf %11 : vector<1x256xf32>
    %13 = math.exp %12 : vector<1x256xf32>
    %cst_10 = arith.constant 1.000000e+00 : f32
    %14 = vector.broadcast %cst_10 : f32 to vector<1x256xf32>
    %15 = arith.addf %14, %13 : vector<1x256xf32>
    %16 = arith.divf %14, %15 : vector<1x256xf32>
    %17 = vector.extract_strided_slice %16 {offsets = [0, 0], sizes = [1, 64], strides = [1, 1]} : vector<1x256xf32> to vector<1x64xf32>
    %18 = vector.extract_strided_slice %16 {offsets = [0, 64], sizes = [1, 64], strides = [1, 1]} : vector<1x256xf32> to vector<1x64xf32>
    %19 = vector.extract_strided_slice %11 {offsets = [0, 128], sizes = [1, 64], strides = [1, 1]} : vector<1x256xf32> to vector<1x64xf32>
    %20 = math.tanh %19 : vector<1x64xf32>
    %21 = vector.extract_strided_slice %16 {offsets = [0, 192], sizes = [1, 64], strides = [1, 1]} : vector<1x256xf32> to vector<1x64xf32>
    %22 = arith.mulf %18, %8 : vector<1x64xf32>
    %23 = arith.mulf %17, %20 : vector<1x64xf32>
    %24 = arith.addf %22, %23 : vector<1x64xf32>
    %25 = math.tanh %24 : vector<1x64xf32>
    %26 = arith.mulf %21, %25 : vector<1x64xf32>
    %27 = vector.extract_strided_slice %5 {offsets = [1, 0], sizes = [1, 256], strides = [1, 1]} : vector<6x256xf32> to vector<1x256xf32>
    %cst_11 = arith.constant dense<0.000000e+00> : vector<1x256xf32>
    %28 = tpu.matmul %26, %6, %cst_11 {dimension_numbers = #tpu.dot_dimension_numbers<[1], [0], [0], [1], [0, 0, 1, 1], [], []>} : vector<1x64xf32>, vector<64x256xf32>, vector<1x256xf32> -> vector<1x256xf32>
    %29 = arith.addf %27, %28 : vector<1x256xf32>
    %30 = arith.negf %29 : vector<1x256xf32>
    %31 = math.exp %30 : vector<1x256xf32>
    %cst_12 = arith.constant 1.000000e+00 : f32
    %32 = vector.broadcast %cst_12 : f32 to vector<1x256xf32>
    %33 = arith.addf %32, %31 : vector<1x256xf32>
    %34 = arith.divf %32, %33 : vector<1x256xf32>
    %35 = vector.extract_strided_slice %34 {offsets = [0, 0], sizes = [1, 64], strides = [1, 1]} : vector<1x256xf32> to vector<1x64xf32>
    %36 = vector.extract_strided_slice %34 {offsets = [0, 64], sizes = [1, 64], strides = [1, 1]} : vector<1x256xf32> to vector<1x64xf32>
    %37 = vector.extract_strided_slice %29 {offsets = [0, 128], sizes = [1, 64], strides = [1, 1]} : vector<1x256xf32> to vector<1x64xf32>
    %38 = math.tanh %37 : vector<1x64xf32>
    %39 = vector.extract_strided_slice %34 {offsets = [0, 192], sizes = [1, 64], strides = [1, 1]} : vector<1x256xf32> to vector<1x64xf32>
    %40 = arith.mulf %36, %24 : vector<1x64xf32>
    %41 = arith.mulf %35, %38 : vector<1x64xf32>
    %42 = arith.addf %40, %41 : vector<1x64xf32>
    %43 = math.tanh %42 : vector<1x64xf32>
    %44 = arith.mulf %39, %43 : vector<1x64xf32>
    %45 = vector.extract_strided_slice %5 {offsets = [2, 0], sizes = [1, 256], strides = [1, 1]} : vector<6x256xf32> to vector<1x256xf32>
    %cst_13 = arith.constant dense<0.000000e+00> : vector<1x256xf32>
    %46 = tpu.matmul %44, %6, %cst_13 {dimension_numbers = #tpu.dot_dimension_numbers<[1], [0], [0], [1], [0, 0, 1, 1], [], []>} : vector<1x64xf32>, vector<64x256xf32>, vector<1x256xf32> -> vector<1x256xf32>
    %47 = arith.addf %45, %46 : vector<1x256xf32>
    %48 = arith.negf %47 : vector<1x256xf32>
    %49 = math.exp %48 : vector<1x256xf32>
    %cst_14 = arith.constant 1.000000e+00 : f32
    %50 = vector.broadcast %cst_14 : f32 to vector<1x256xf32>
    %51 = arith.addf %50, %49 : vector<1x256xf32>
    %52 = arith.divf %50, %51 : vector<1x256xf32>
    %53 = vector.extract_strided_slice %52 {offsets = [0, 0], sizes = [1, 64], strides = [1, 1]} : vector<1x256xf32> to vector<1x64xf32>
    %54 = vector.extract_strided_slice %52 {offsets = [0, 64], sizes = [1, 64], strides = [1, 1]} : vector<1x256xf32> to vector<1x64xf32>
    %55 = vector.extract_strided_slice %47 {offsets = [0, 128], sizes = [1, 64], strides = [1, 1]} : vector<1x256xf32> to vector<1x64xf32>
    %56 = math.tanh %55 : vector<1x64xf32>
    %57 = vector.extract_strided_slice %52 {offsets = [0, 192], sizes = [1, 64], strides = [1, 1]} : vector<1x256xf32> to vector<1x64xf32>
    %58 = arith.mulf %54, %42 : vector<1x64xf32>
    %59 = arith.mulf %53, %56 : vector<1x64xf32>
    %60 = arith.addf %58, %59 : vector<1x64xf32>
    %61 = math.tanh %60 : vector<1x64xf32>
    %62 = arith.mulf %57, %61 : vector<1x64xf32>
    %63 = vector.extract_strided_slice %5 {offsets = [3, 0], sizes = [1, 256], strides = [1, 1]} : vector<6x256xf32> to vector<1x256xf32>
    %cst_15 = arith.constant dense<0.000000e+00> : vector<1x256xf32>
    %64 = tpu.matmul %62, %6, %cst_15 {dimension_numbers = #tpu.dot_dimension_numbers<[1], [0], [0], [1], [0, 0, 1, 1], [], []>} : vector<1x64xf32>, vector<64x256xf32>, vector<1x256xf32> -> vector<1x256xf32>
    %65 = arith.addf %63, %64 : vector<1x256xf32>
    %66 = arith.negf %65 : vector<1x256xf32>
    %67 = math.exp %66 : vector<1x256xf32>
    %cst_16 = arith.constant 1.000000e+00 : f32
    %68 = vector.broadcast %cst_16 : f32 to vector<1x256xf32>
    %69 = arith.addf %68, %67 : vector<1x256xf32>
    %70 = arith.divf %68, %69 : vector<1x256xf32>
    %71 = vector.extract_strided_slice %70 {offsets = [0, 0], sizes = [1, 64], strides = [1, 1]} : vector<1x256xf32> to vector<1x64xf32>
    %72 = vector.extract_strided_slice %70 {offsets = [0, 64], sizes = [1, 64], strides = [1, 1]} : vector<1x256xf32> to vector<1x64xf32>
    %73 = vector.extract_strided_slice %65 {offsets = [0, 128], sizes = [1, 64], strides = [1, 1]} : vector<1x256xf32> to vector<1x64xf32>
    %74 = math.tanh %73 : vector<1x64xf32>
    %75 = vector.extract_strided_slice %70 {offsets = [0, 192], sizes = [1, 64], strides = [1, 1]} : vector<1x256xf32> to vector<1x64xf32>
    %76 = arith.mulf %72, %60 : vector<1x64xf32>
    %77 = arith.mulf %71, %74 : vector<1x64xf32>
    %78 = arith.addf %76, %77 : vector<1x64xf32>
    %79 = math.tanh %78 : vector<1x64xf32>
    %80 = arith.mulf %75, %79 : vector<1x64xf32>
    %81 = vector.extract_strided_slice %5 {offsets = [4, 0], sizes = [1, 256], strides = [1, 1]} : vector<6x256xf32> to vector<1x256xf32>
    %cst_17 = arith.constant dense<0.000000e+00> : vector<1x256xf32>
    %82 = tpu.matmul %80, %6, %cst_17 {dimension_numbers = #tpu.dot_dimension_numbers<[1], [0], [0], [1], [0, 0, 1, 1], [], []>} : vector<1x64xf32>, vector<64x256xf32>, vector<1x256xf32> -> vector<1x256xf32>
    %83 = arith.addf %81, %82 : vector<1x256xf32>
    %84 = arith.negf %83 : vector<1x256xf32>
    %85 = math.exp %84 : vector<1x256xf32>
    %cst_18 = arith.constant 1.000000e+00 : f32
    %86 = vector.broadcast %cst_18 : f32 to vector<1x256xf32>
    %87 = arith.addf %86, %85 : vector<1x256xf32>
    %88 = arith.divf %86, %87 : vector<1x256xf32>
    %89 = vector.extract_strided_slice %88 {offsets = [0, 0], sizes = [1, 64], strides = [1, 1]} : vector<1x256xf32> to vector<1x64xf32>
    %90 = vector.extract_strided_slice %88 {offsets = [0, 64], sizes = [1, 64], strides = [1, 1]} : vector<1x256xf32> to vector<1x64xf32>
    %91 = vector.extract_strided_slice %83 {offsets = [0, 128], sizes = [1, 64], strides = [1, 1]} : vector<1x256xf32> to vector<1x64xf32>
    %92 = math.tanh %91 : vector<1x64xf32>
    %93 = vector.extract_strided_slice %88 {offsets = [0, 192], sizes = [1, 64], strides = [1, 1]} : vector<1x256xf32> to vector<1x64xf32>
    %94 = arith.mulf %90, %78 : vector<1x64xf32>
    %95 = arith.mulf %89, %92 : vector<1x64xf32>
    %96 = arith.addf %94, %95 : vector<1x64xf32>
    %97 = math.tanh %96 : vector<1x64xf32>
    %98 = arith.mulf %93, %97 : vector<1x64xf32>
    %99 = vector.extract_strided_slice %5 {offsets = [5, 0], sizes = [1, 256], strides = [1, 1]} : vector<6x256xf32> to vector<1x256xf32>
    %cst_19 = arith.constant dense<0.000000e+00> : vector<1x256xf32>
    %100 = tpu.matmul %98, %6, %cst_19 {dimension_numbers = #tpu.dot_dimension_numbers<[1], [0], [0], [1], [0, 0, 1, 1], [], []>} : vector<1x64xf32>, vector<64x256xf32>, vector<1x256xf32> -> vector<1x256xf32>
    %101 = arith.addf %99, %100 : vector<1x256xf32>
    %102 = arith.negf %101 : vector<1x256xf32>
    %103 = math.exp %102 : vector<1x256xf32>
    %cst_20 = arith.constant 1.000000e+00 : f32
    %104 = vector.broadcast %cst_20 : f32 to vector<1x256xf32>
    %105 = arith.addf %104, %103 : vector<1x256xf32>
    %106 = arith.divf %104, %105 : vector<1x256xf32>
    %107 = vector.extract_strided_slice %106 {offsets = [0, 0], sizes = [1, 64], strides = [1, 1]} : vector<1x256xf32> to vector<1x64xf32>
    %108 = vector.extract_strided_slice %106 {offsets = [0, 64], sizes = [1, 64], strides = [1, 1]} : vector<1x256xf32> to vector<1x64xf32>
    %109 = vector.extract_strided_slice %101 {offsets = [0, 128], sizes = [1, 64], strides = [1, 1]} : vector<1x256xf32> to vector<1x64xf32>
    %110 = math.tanh %109 : vector<1x64xf32>
    %111 = vector.extract_strided_slice %106 {offsets = [0, 192], sizes = [1, 64], strides = [1, 1]} : vector<1x256xf32> to vector<1x64xf32>
    %112 = arith.mulf %108, %96 : vector<1x64xf32>
    %113 = arith.mulf %107, %110 : vector<1x64xf32>
    %114 = arith.addf %112, %113 : vector<1x64xf32>
    %115 = math.tanh %114 : vector<1x64xf32>
    %116 = arith.mulf %111, %115 : vector<1x64xf32>
    %117 = vector.extract_strided_slice %26 {offsets = [0, 0], sizes = [1, 32], strides = [1, 1]} : vector<1x64xf32> to vector<1x32xf32>
    %118 = vector.extract_strided_slice %116 {offsets = [0, 32], sizes = [1, 32], strides = [1, 1]} : vector<1x64xf32> to vector<1x32xf32>
    %119 = tpu.concatenate %117, %118 in 1 : vector<1x32xf32>, vector<1x32xf32> -> vector<1x64xf32>
    %120 = vector.extract_strided_slice %44 {offsets = [0, 0], sizes = [1, 32], strides = [1, 1]} : vector<1x64xf32> to vector<1x32xf32>
    %121 = vector.extract_strided_slice %98 {offsets = [0, 32], sizes = [1, 32], strides = [1, 1]} : vector<1x64xf32> to vector<1x32xf32>
    %122 = tpu.concatenate %120, %121 in 1 : vector<1x32xf32>, vector<1x32xf32> -> vector<1x64xf32>
    %123 = vector.extract_strided_slice %62 {offsets = [0, 0], sizes = [1, 32], strides = [1, 1]} : vector<1x64xf32> to vector<1x32xf32>
    %124 = vector.extract_strided_slice %80 {offsets = [0, 32], sizes = [1, 32], strides = [1, 1]} : vector<1x64xf32> to vector<1x32xf32>
    %125 = tpu.concatenate %123, %124 in 1 : vector<1x32xf32>, vector<1x32xf32> -> vector<1x64xf32>
    %126 = vector.extract_strided_slice %80 {offsets = [0, 0], sizes = [1, 32], strides = [1, 1]} : vector<1x64xf32> to vector<1x32xf32>
    %127 = vector.extract_strided_slice %62 {offsets = [0, 32], sizes = [1, 32], strides = [1, 1]} : vector<1x64xf32> to vector<1x32xf32>
    %128 = tpu.concatenate %126, %127 in 1 : vector<1x32xf32>, vector<1x32xf32> -> vector<1x64xf32>
    %129 = vector.extract_strided_slice %98 {offsets = [0, 0], sizes = [1, 32], strides = [1, 1]} : vector<1x64xf32> to vector<1x32xf32>
    %130 = vector.extract_strided_slice %44 {offsets = [0, 32], sizes = [1, 32], strides = [1, 1]} : vector<1x64xf32> to vector<1x32xf32>
    %131 = tpu.concatenate %129, %130 in 1 : vector<1x32xf32>, vector<1x32xf32> -> vector<1x64xf32>
    %132 = vector.extract_strided_slice %116 {offsets = [0, 0], sizes = [1, 32], strides = [1, 1]} : vector<1x64xf32> to vector<1x32xf32>
    %133 = vector.extract_strided_slice %26 {offsets = [0, 32], sizes = [1, 32], strides = [1, 1]} : vector<1x64xf32> to vector<1x32xf32>
    %134 = tpu.concatenate %132, %133 in 1 : vector<1x32xf32>, vector<1x32xf32> -> vector<1x64xf32>
    %cst_21 = arith.constant 0.000000e+00 : f32
    %135 = vector.broadcast %cst_21 : f32 to vector<2x64xf32>
    %136 = tpu.concatenate %119, %122, %125, %128, %131, %134, %135 in 0 : vector<1x64xf32>, vector<1x64xf32>, vector<1x64xf32>, vector<1x64xf32>, vector<1x64xf32>, vector<1x64xf32>, vector<2x64xf32> -> vector<8x64xf32>
    %c0_22 = arith.constant 0 : index
    %c0_23 = arith.constant 0 : index
    %137 = vector.load %arg4[%c0_22, %c0_23] : memref<64x128xf32, #tpu.memory_space<vmem>>, vector<64x128xf32>
    %cst_24 = arith.constant dense<0.000000e+00> : vector<8x128xf32>
    %138 = tpu.matmul %136, %137, %cst_24 {dimension_numbers = #tpu.dot_dimension_numbers<[1], [0], [0], [1], [0, 0, 1, 1], [], []>} : vector<8x64xf32>, vector<64x128xf32>, vector<8x128xf32> -> vector<8x128xf32>
    %c0_25 = arith.constant 0 : index
    %c0_26 = arith.constant 0 : index
    %139 = vector.load %arg5[%c0_25, %c0_26] : memref<1x128xf32, #tpu.memory_space<vmem>>, vector<1x128xf32>
    %140 = vector.broadcast %139 : vector<1x128xf32> to vector<8x128xf32>
    %141 = arith.addf %138, %140 : vector<8x128xf32>
    %142 = arith.negf %141 : vector<8x128xf32>
    %143 = math.exp %142 : vector<8x128xf32>
    %cst_27 = arith.constant 1.000000e+00 : f32
    %144 = vector.broadcast %cst_27 : f32 to vector<8x128xf32>
    %145 = arith.addf %144, %143 : vector<8x128xf32>
    %146 = arith.divf %144, %145 : vector<8x128xf32>
    %c0_28 = arith.constant 0 : index
    %c0_29 = arith.constant 0 : index
    %147 = vector.load %arg6[%c0_28, %c0_29] : memref<8x128xf32, #tpu.memory_space<vmem>>, vector<8x128xf32>
    tpu.vector_store %arg6[%c0_28, %c0_29], %146 {strides = array<i32>} : memref<8x128xf32, #tpu.memory_space<vmem>>, vector<8x128xf32>,
    return
  }
}

</mosaic_0001>

<llo_original>
// kernel: classification_forward.1
$region0: #{classification_forward.1}
  #allocation0 [shape = 'u32[]', space=smem, size = 0x4, offset = 0x4, fixed_abs, tag = 'smem constant byte address 0x4 - core index']
  #allocation1 [shape = 'u32[144,128]{1,0:T(1,128)}', space=vmem, size = 0x12000, scoped, tag = 'internal scratch']
  %s0 = inlined_call_operand.vmem [shape: f32[6,32], index: 0, kind: input, shape index: {}]
  %s1 = inlined_call_operand.vmem [shape: f32[32,256], index: 1, kind: input, shape index: {}]
  %s2 = inlined_call_operand.vmem [shape: f32[1,256], index: 2, kind: input, shape index: {}]
  %s3 = inlined_call_operand.vmem [shape: f32[64,256], index: 3, kind: input, shape index: {}]
  %s4 = inlined_call_operand.vmem [shape: f32[64,128], index: 4, kind: input, shape index: {}]
  %s5 = inlined_call_operand.vmem [shape: f32[1,128], index: 5, kind: input, shape index: {}]
  %s6 = inlined_call_operand.vmem [shape: f32[8,128], index: 6, kind: output, shape index: {}]
  %s7 = sld [smem:[#allocation0]]
  $region34: #{classification_forward.1} parent=0
    _
  %s9 = ssub.s32 1, %s7
  %s10 = scalar_select 0, %s9, %s7
  // Predicated region
  $region2: #{classification_forward.1} parent=0 // pred_check
    _
  $region3: #{classification_forward.1} parent=0 // pred_check_branch
    %12 = sbr.rel (0) target = $region5
  $region4: #{classification_forward.1} parent=0 // pred_region
    _
  $region5: #{classification_forward.1} parent=0 // pred_fallthru
    _
  // Predicated region
  $region6: #{classification_forward.1} parent=0 // pred_check
    _
  $region7: #{classification_forward.1} parent=0 // pred_check_branch
    %14 = sbr.rel (0) target = $region9
  $region8: #{classification_forward.1} parent=0 // pred_region
    _
  $region9: #{classification_forward.1} parent=0 // pred_fallthru
    _
  // Predicated region
  $region10: #{classification_forward.1} parent=0 // pred_check
    _
  $region11: #{classification_forward.1} parent=0 // pred_check_branch
    %16 = sbr.rel (0) target = $region13
  $region12: #{classification_forward.1} parent=0 // pred_region
    _
  $region13: #{classification_forward.1} parent=0 // pred_fallthru
    _
  // Predicated region
  $region14: #{classification_forward.1} parent=0 // pred_check
    _
  $region15: #{classification_forward.1} parent=0 // pred_check_branch
    %18 = sbr.rel (0) target = $region17
  $region16: #{classification_forward.1} parent=0 // pred_region
    _
  $region17: #{classification_forward.1} parent=0 // pred_fallthru
    _
  // Predicated region
  $region18: #{classification_forward.1} parent=0 // pred_check
    _
  $region19: #{classification_forward.1} parent=0 // pred_check_branch
    %20 = sbr.rel (0) target = $region21
  $region20: #{classification_forward.1} parent=0 // pred_region
    _
  $region21: #{classification_forward.1} parent=0 // pred_fallthru
    _
  // Predicated region
  $region22: #{classification_forward.1} parent=0 // pred_check
    _
  $region23: #{classification_forward.1} parent=0 // pred_check_branch
    %22 = sbr.rel (0) target = $region25
  $region24: #{classification_forward.1} parent=0 // pred_region
    _
  $region25: #{classification_forward.1} parent=0 // pred_fallthru
    _
  %v23 = vld [vmem:[%s0] sm:$0x3f]
  %v24 = vld [vmem:[%s1] sm:$0xff]
  %v25 = vld [vmem:[%s1 + $0x8] sm:$0xff]
  %v26 = vld [vmem:[%s1 + $0x10] sm:$0xff]
  %v27 = vld [vmem:[%s1 + $0x18] sm:$0xff]
  %v28 = vld [vmem:[%s1 + $0x20] sm:$0xff]
  %v29 = vld [vmem:[%s1 + $0x28] sm:$0xff]
  %v30 = vld [vmem:[%s1 + $0x30] sm:$0xff]
  %v31 = vld [vmem:[%s1 + $0x38] sm:$0xff]
  %v32 = vld [vmem:[%s2] sm:$0x3]
  %v34 = vlaneseq
  %v35 = vshrl.u32 %v34, 7
  %v36 = vsub.s32 0, %v35
  %v37 = vrot.slane %v32, %v36
  %v38 = vlaneseq
  %v39 = vshrl.u32 %v38, 7
  %v40 = vsub.s32 1, %v39
  %v41 = vrot.slane %v32, %v40
  %vm44 = vcmask 261120
  %v46 = vsel %vm44, %v23, 0
  %48 = vmatprep.subr.mxu0 0.0
  %49 = vmatpush1.msra.mxu0 0.0
  %50 = vmatprep.subr.mxu0 0.0
  %51 = vmatpush1.msra.mxu0 0.0
  %52 = vmatprep.subr.mxu0 0.0
  %53 = vmatpush1.msra.mxu0 0.0
  %54 = vmatprep.subr.mxu0 0.0
  %55 = vmatpush1.msra.mxu0 0.0
  %56 = vmatprep.subr.mxu0 0.0
  %57 = vmatpush1.msra.mxu0 0.0
  %58 = vmatprep.subr.mxu0 0.0
  %59 = vmatpush1.msra.mxu0 0.0
  %60 = vmatprep.subr.mxu0 0.0
  %61 = vmatpush1.msra.mxu0 0.0
  %62 = vmatprep.subr.mxu0 0.0
  %63 = vmatpush1.msra.mxu0 0.0
  %64 = vmatprep.subr.mxu0 0.0
  %65 = vmatpush1.msra.mxu0 0.0
  %66 = vmatprep.subr.mxu0 0.0
  %67 = vmatpush1.msra.mxu0 0.0
  %68 = vmatprep.subr.mxu0 0.0
  %69 = vmatpush1.msra.mxu0 0.0
  %70 = vmatprep.subr.mxu0 0.0
  %71 = vmatpush1.msra.mxu0 0.0
  %72 = vmatprep.subr.mxu0 %v31
  %73 = vmatpush1.msra.mxu0 %v30
  %74 = vmatprep.subr.mxu0 %v29
  %75 = vmatpush1.msra.mxu0 %v28
  %76 = vmatprep.subr.mxu0 %v27
  %77 = vmatpush1.msra.mxu0 %v26
  %78 = vmatprep.subr.mxu0 %v25
  %79 = vmatpush1.msra.mxu0 %v24
  %80 = vmatprep.subr.mxu0 0.0
  %81 = vmatpush2.msra.mxu0 0.0
  %82 = vmatprep.subr.mxu0 0.0
  %83 = vmatpush2.msra.mxu0 0.0
  %84 = vmatprep.subr.mxu0 0.0
  %85 = vmatpush2.msra.mxu0 0.0
  %86 = vmatprep.subr.mxu0 0.0
  %87 = vmatpush2.msra.mxu0 0.0
  %88 = vmatprep.subr.mxu0 0.0
  %89 = vmatpush2.msra.mxu0 0.0
  %90 = vmatprep.subr.mxu0 0.0
  %91 = vmatpush2.msra.mxu0 0.0
  %92 = vmatprep.subr.mxu0 0.0
  %93 = vmatpush2.msra.mxu0 0.0
  %94 = vmatprep.subr.mxu0 0.0
  %95 = vmatpush2.msra.mxu0 0.0
  %96 = vmatprep.subr.mxu0 0.0
  %97 = vmatpush2.msra.mxu0 0.0
  %98 = vmatprep.subr.mxu0 0.0
  %99 = vmatpush2.msra.mxu0 0.0
  %100 = vmatprep.subr.mxu0 0.0
  %101 = vmatpush2.msra.mxu0 0.0
  %102 = vmatprep.subr.mxu0 0.0
  %103 = vmatpush2.msra.mxu0 0.0
  %104 = vmatprep.subr.mxu0 0.0
  %105 = vmatpush2.msra.mxu0 0.0
  %106 = vmatprep.subr.mxu0 0.0
  %107 = vmatpush2.msra.mxu0 0.0
  %108 = vmatprep.subr.mxu0 0.0
  %109 = vmatpush2.msra.mxu0 0.0
  %110 = vmatprep.subr.mxu0 0.0
  %111 = vmatpush2.msra.mxu0 0.0
  %112 = vmatprep.mubr.f32.mxu0 0.0
  %113 = vmatmul.mubr.f32.gmra.mxu0 %v46
  %v114 = vpop.f32.mrf.mxu0
  %v115 = vadd.f32 %v37, %v114
  %v116 = vpop.f32.mrf.mxu0
  %v117 = vadd.f32 %v41, %v116
  %118 = vdwg.mxu0
  %v119 = vld [vmem:[%s3] sm:$0xff]
  %v120 = vld [vmem:[%s3 + $0x8] sm:$0xff]
  %v121 = vld [vmem:[%s3 + $0x10] sm:$0xff]
  %v122 = vld [vmem:[%s3 + $0x18] sm:$0xff]
  %v123 = vld [vmem:[%s3 + $0x20] sm:$0xff]
  %v124 = vld [vmem:[%s3 + $0x28] sm:$0xff]
  %v125 = vld [vmem:[%s3 + $0x30] sm:$0xff]
  %v126 = vld [vmem:[%s3 + $0x38] sm:$0xff]
  %v127 = vld [vmem:[%s3 + $0x40] sm:$0xff]
  %v128 = vld [vmem:[%s3 + $0x48] sm:$0xff]
  %v129 = vld [vmem:[%s3 + $0x50] sm:$0xff]
  %v130 = vld [vmem:[%s3 + $0x58] sm:$0xff]
  %v131 = vld [vmem:[%s3 + $0x60] sm:$0xff]
  %v132 = vld [vmem:[%s3 + $0x68] sm:$0xff]
  %v133 = vld [vmem:[%s3 + $0x70] sm:$0xff]
  %v134 = vld [vmem:[%s3 + $0x78] sm:$0xff]
  %vm135 = vcmask 523264
  %v137 = vsel %vm135, 0.0, 0
  %139 = vmatprep.subr.mxu0 0.0
  %140 = vmatpush1.msra.mxu0 0.0
  %141 = vmatprep.subr.mxu0 0.0
  %142 = vmatpush1.msra.mxu0 0.0
  %143 = vmatprep.subr.mxu0 0.0
  %144 = vmatpush1.msra.mxu0 0.0
  %145 = vmatprep.subr.mxu0 0.0
  %146 = vmatpush1.msra.mxu0 0.0
  %147 = vmatprep.subr.mxu0 0.0
  %148 = vmatpush1.msra.mxu0 0.0
  %149 = vmatprep.subr.mxu0 0.0
  %150 = vmatpush1.msra.mxu0 0.0
  %151 = vmatprep.subr.mxu0 0.0
  %152 = vmatpush1.msra.mxu0 0.0
  %153 = vmatprep.subr.mxu0 0.0
  %154 = vmatpush1.msra.mxu0 0.0
  %155 = vmatprep.subr.mxu0 %v134
  %156 = vmatpush1.msra.mxu0 %v133
  %157 = vmatprep.subr.mxu0 %v132
  %158 = vmatpush1.msra.mxu0 %v131
  %159 = vmatprep.subr.mxu0 %v130
  %160 = vmatpush1.msra.mxu0 %v129
  %161 = vmatprep.subr.mxu0 %v128
  %162 = vmatpush1.msra.mxu0 %v127
  %163 = vmatprep.subr.mxu0 %v126
  %164 = vmatpush1.msra.mxu0 %v125
  %165 = vmatprep.subr.mxu0 %v124
  %166 = vmatpush1.msra.mxu0 %v123
  %167 = vmatprep.subr.mxu0 %v122
  %168 = vmatpush1.msra.mxu0 %v121
  %169 = vmatprep.subr.mxu0 %v120
  %170 = vmatpush1.msra.mxu0 %v119
  %171 = vmatprep.subr.mxu0 0.0
  %172 = vmatpush2.msra.mxu0 0.0
  %173 = vmatprep.subr.mxu0 0.0
  %174 = vmatpush2.msra.mxu0 0.0
  %175 = vmatprep.subr.mxu0 0.0
  %176 = vmatpush2.msra.mxu0 0.0
  %177 = vmatprep.subr.mxu0 0.0
  %178 = vmatpush2.msra.mxu0 0.0
  %179 = vmatprep.subr.mxu0 0.0
  %180 = vmatpush2.msra.mxu0 0.0
  %181 = vmatprep.subr.mxu0 0.0
  %182 = vmatpush2.msra.mxu0 0.0
  %183 = vmatprep.subr.mxu0 0.0
  %184 = vmatpush2.msra.mxu0 0.0
  %185 = vmatprep.subr.mxu0 0.0
  %186 = vmatpush2.msra.mxu0 0.0
  %187 = vmatprep.subr.mxu0 0.0
  %188 = vmatpush2.msra.mxu0 0.0
  %189 = vmatprep.subr.mxu0 0.0
  %190 = vmatpush2.msra.mxu0 0.0
  %191 = vmatprep.subr.mxu0 0.0
  %192 = vmatpush2.msra.mxu0 0.0
  %193 = vmatprep.subr.mxu0 0.0
  %194 = vmatpush2.msra.mxu0 0.0
  %195 = vmatprep.subr.mxu0 0.0
  %196 = vmatpush2.msra.mxu0 0.0
  %197 = vmatprep.subr.mxu0 0.0
  %198 = vmatpush2.msra.mxu0 0.0
  %199 = vmatprep.subr.mxu0 0.0
  %200 = vmatpush2.msra.mxu0 0.0
  %201 = vmatprep.subr.mxu0 0.0
  %202 = vmatpush2.msra.mxu0 0.0
  %203 = vmatprep.mubr.f32.mxu0 0.0
  %204 = vmatmul.mubr.f32.gmra.mxu0 %v137
  %v205 = vpop.f32.mrf.mxu0
  %v206 = vadd.f32 0.0, %v205
  %v207 = vpop.f32.mrf.mxu0
  %v208 = vadd.f32 0.0, %v207
  %209 = vdwg.mxu0
  %v210 = vadd.f32 %v115, %v206
  %v211 = vadd.f32 %v117, %v208
  %v212 = vxor.u32 %v210, 2147483648
  %v213 = vxor.u32 %v211, 2147483648
  %v214 = vmul.f32 %v212, 1.442695
  %v215 = vpow.pop %v214
  %v216 = vmul.f32 %v213, 1.442695
  %v217 = vpow.pop %v216
  %v218 = vadd.f32 %v215, 1.0
  %v219 = vadd.f32 %v217, 1.0
  %v220 = vrcp.pop %v218
  %v221 = vmul.f32 1.0, %v220
  %v222 = vrcp.pop %v219
  %v223 = vmul.f32 1.0, %v222
  %v224 = vtanh.pop %v211
  %v225 = vmul.f32 %v221, 0.0
  %v226 = vmul.f32 %v221, %v224
  %228 = vrot.lane.b32.xlu0 %v226, 64
  %v229 = vpop.permute.xlu0 %228
  %v231 = vadd.f32 %v225, %v229
  %v232 = vtanh.pop %v231
  %v233 = vmul.f32 %v223, %v232
  %235 = vrot.lane.b32.xlu0 %v233, 64
  %v236 = vpop.permute.xlu0 %235
  %v237 = vsel %vm135, %v236, 0
  %239 = vmatprep.subr.mxu0 0.0
  %240 = vmatpush1.msra.mxu0 0.0
  %241 = vmatprep.subr.mxu0 0.0
  %242 = vmatpush1.msra.mxu0 0.0
  %243 = vmatprep.subr.mxu0 0.0
  %244 = vmatpush1.msra.mxu0 0.0
  %245 = vmatprep.subr.mxu0 0.0
  %246 = vmatpush1.msra.mxu0 0.0
  %247 = vmatprep.subr.mxu0 0.0
  %248 = vmatpush1.msra.mxu0 0.0
  %249 = vmatprep.subr.mxu0 0.0
  %250 = vmatpush1.msra.mxu0 0.0
  %251 = vmatprep.subr.mxu0 0.0
  %252 = vmatpush1.msra.mxu0 0.0
  %253 = vmatprep.subr.mxu0 0.0
  %254 = vmatpush1.msra.mxu0 0.0
  %255 = vmatprep.subr.mxu0 %v134
  %256 = vmatpush1.msra.mxu0 %v133
  %257 = vmatprep.subr.mxu0 %v132
  %258 = vmatpush1.msra.mxu0 %v131
  %259 = vmatprep.subr.mxu0 %v130
  %260 = vmatpush1.msra.mxu0 %v129
  %261 = vmatprep.subr.mxu0 %v128
  %262 = vmatpush1.msra.mxu0 %v127
  %263 = vmatprep.subr.mxu0 %v126
  %264 = vmatpush1.msra.mxu0 %v125
  %265 = vmatprep.subr.mxu0 %v124
  %266 = vmatpush1.msra.mxu0 %v123
  %267 = vmatprep.subr.mxu0 %v122
  %268 = vmatpush1.msra.mxu0 %v121
  %269 = vmatprep.subr.mxu0 %v120
  %270 = vmatpush1.msra.mxu0 %v119
  %271 = vmatprep.subr.mxu0 0.0
  %272 = vmatpush2.msra.mxu0 0.0
  %273 = vmatprep.subr.mxu0 0.0
  %274 = vmatpush2.msra.mxu0 0.0
  %275 = vmatprep.subr.mxu0 0.0
  %276 = vmatpush2.msra.mxu0 0.0
  %277 = vmatprep.subr.mxu0 0.0
  %278 = vmatpush2.msra.mxu0 0.0
  %279 = vmatprep.subr.mxu0 0.0
  %280 = vmatpush2.msra.mxu0 0.0
  %281 = vmatprep.subr.mxu0 0.0
  %282 = vmatpush2.msra.mxu0 0.0
  %283 = vmatprep.subr.mxu0 0.0
  %284 = vmatpush2.msra.mxu0 0.0
  %285 = vmatprep.subr.mxu0 0.0
  %286 = vmatpush2.msra.mxu0 0.0
  %287 = vmatprep.subr.mxu0 0.0
  %288 = vmatpush2.msra.mxu0 0.0
  %289 = vmatprep.subr.mxu0 0.0
  %290 = vmatpush2.msra.mxu0 0.0
  %291 = vmatprep.subr.mxu0 0.0
  %292 = vmatpush2.msra.mxu0 0.0
  %293 = vmatprep.subr.mxu0 0.0
  %294 = vmatpush2.msra.mxu0 0.0
  %295 = vmatprep.subr.mxu0 0.0
  %296 = vmatpush2.msra.mxu0 0.0
  %297 = vmatprep.subr.mxu0 0.0
  %298 = vmatpush2.msra.mxu0 0.0
  %299 = vmatprep.subr.mxu0 0.0
  %300 = vmatpush2.msra.mxu0 0.0
  %301 = vmatprep.subr.mxu0 0.0
  %302 = vmatpush2.msra.mxu0 0.0
  %303 = vmatprep.mubr.f32.mxu0 0.0
  %304 = vmatmul.mubr.f32.gmra.mxu0 %v237
  %v305 = vpop.f32.mrf.mxu0
  %v306 = vadd.f32 0.0, %v305
  %v307 = vpop.f32.mrf.mxu0
  %v308 = vadd.f32 0.0, %v307
  %309 = vdwg.mxu0
  %v312 = vrot.slane %v306, 7
  %v313 = vrot.slane %v308, 7
  %v316 = vadd.f32 %v115, %v312
  %v317 = vadd.f32 %v117, %v313
  %v318 = vxor.u32 %v316, 2147483648
  %v319 = vxor.u32 %v317, 2147483648
  %v320 = vmul.f32 %v318, 1.442695
  %v321 = vpow.pop %v320
  %v322 = vmul.f32 %v319, 1.442695
  %v323 = vpow.pop %v322
  %v324 = vadd.f32 %v321, 1.0
  %v325 = vadd.f32 %v323, 1.0
  %v326 = vrcp.pop %v324
  %v327 = vmul.f32 1.0, %v326
  %v328 = vrcp.pop %v325
  %v329 = vmul.f32 1.0, %v328
  %v330 = vtanh.pop %v317
  %v332 = vrot.slane %v231, 7
  %v334 = vmul.f32 %v327, %v332
  %v335 = vmul.f32 %v327, %v330
  %337 = vrot.lane.b32.xlu0 %v335, 64
  %v338 = vpop.permute.xlu0 %337
  %v340 = vadd.f32 %v334, %v338
  %v341 = vtanh.pop %v340
  %v342 = vmul.f32 %v329, %v341
  %v344 = vrot.slane %v342, 1
  %345 = vrot.lane.b32.xlu0 %v344, 64
  %v346 = vpop.permute.xlu0 %345
  %v347 = vsel %vm135, %v346, 0
  %349 = vmatprep.subr.mxu0 0.0
  %350 = vmatpush1.msra.mxu0 0.0
  %351 = vmatprep.subr.mxu0 0.0
  %352 = vmatpush1.msra.mxu0 0.0
  %353 = vmatprep.subr.mxu0 0.0
  %354 = vmatpush1.msra.mxu0 0.0
  %355 = vmatprep.subr.mxu0 0.0
  %356 = vmatpush1.msra.mxu0 0.0
  %357 = vmatprep.subr.mxu0 0.0
  %358 = vmatpush1.msra.mxu0 0.0
  %359 = vmatprep.subr.mxu0 0.0
  %360 = vmatpush1.msra.mxu0 0.0
  %361 = vmatprep.subr.mxu0 0.0
  %362 = vmatpush1.msra.mxu0 0.0
  %363 = vmatprep.subr.mxu0 0.0
  %364 = vmatpush1.msra.mxu0 0.0
  %365 = vmatprep.subr.mxu0 %v134
  %366 = vmatpush1.msra.mxu0 %v133
  %367 = vmatprep.subr.mxu0 %v132
  %368 = vmatpush1.msra.mxu0 %v131
  %369 = vmatprep.subr.mxu0 %v130
  %370 = vmatpush1.msra.mxu0 %v129
  %371 = vmatprep.subr.mxu0 %v128
  %372 = vmatpush1.msra.mxu0 %v127
  %373 = vmatprep.subr.mxu0 %v126
  %374 = vmatpush1.msra.mxu0 %v125
  %375 = vmatprep.subr.mxu0 %v124
  %376 = vmatpush1.msra.mxu0 %v123
  %377 = vmatprep.subr.mxu0 %v122
  %378 = vmatpush1.msra.mxu0 %v121
  %379 = vmatprep.subr.mxu0 %v120
  %380 = vmatpush1.msra.mxu0 %v119
  %381 = vmatprep.subr.mxu0 0.0
  %382 = vmatpush2.msra.mxu0 0.0
  %383 = vmatprep.subr.mxu0 0.0
  %384 = vmatpush2.msra.mxu0 0.0
  %385 = vmatprep.subr.mxu0 0.0
  %386 = vmatpush2.msra.mxu0 0.0
  %387 = vmatprep.subr.mxu0 0.0
  %388 = vmatpush2.msra.mxu0 0.0
  %389 = vmatprep.subr.mxu0 0.0
  %390 = vmatpush2.msra.mxu0 0.0
  %391 = vmatprep.subr.mxu0 0.0
  %392 = vmatpush2.msra.mxu0 0.0
  %393 = vmatprep.subr.mxu0 0.0
  %394 = vmatpush2.msra.mxu0 0.0
  %395 = vmatprep.subr.mxu0 0.0
  %396 = vmatpush2.msra.mxu0 0.0
  %397 = vmatprep.subr.mxu0 0.0
  %398 = vmatpush2.msra.mxu0 0.0
  %399 = vmatprep.subr.mxu0 0.0
  %400 = vmatpush2.msra.mxu0 0.0
  %401 = vmatprep.subr.mxu0 0.0
  %402 = vmatpush2.msra.mxu0 0.0
  %403 = vmatprep.subr.mxu0 0.0
  %404 = vmatpush2.msra.mxu0 0.0
  %405 = vmatprep.subr.mxu0 0.0
  %406 = vmatpush2.msra.mxu0 0.0
  %407 = vmatprep.subr.mxu0 0.0
  %408 = vmatpush2.msra.mxu0 0.0
  %409 = vmatprep.subr.mxu0 0.0
  %410 = vmatpush2.msra.mxu0 0.0
  %411 = vmatprep.subr.mxu0 0.0
  %412 = vmatpush2.msra.mxu0 0.0
  %413 = vmatprep.mubr.f32.mxu0 0.0
  %414 = vmatmul.mubr.f32.gmra.mxu0 %v347
  %v415 = vpop.f32.mrf.mxu0
  %v416 = vadd.f32 0.0, %v415
  %v417 = vpop.f32.mrf.mxu0
  %v418 = vadd.f32 0.0, %v417
  %419 = vdwg.mxu0
  %v422 = vrot.slane %v416, 6
  %v423 = vrot.slane %v418, 6
  %v426 = vadd.f32 %v115, %v422
  %v427 = vadd.f32 %v117, %v423
  %v428 = vxor.u32 %v426, 2147483648
  %v429 = vxor.u32 %v427, 2147483648
  %v430 = vmul.f32 %v428, 1.442695
  %v431 = vpow.pop %v430
  %v432 = vmul.f32 %v429, 1.442695
  %v433 = vpow.pop %v432
  %v434 = vadd.f32 %v431, 1.0
  %v435 = vadd.f32 %v433, 1.0
  %v436 = vrcp.pop %v434
  %v437 = vmul.f32 1.0, %v436
  %v438 = vrcp.pop %v435
  %v439 = vmul.f32 1.0, %v438
  %v440 = vtanh.pop %v427
  %v442 = vrot.slane %v340, 7
  %v444 = vmul.f32 %v437, %v442
  %v445 = vmul.f32 %v437, %v440
  %447 = vrot.lane.b32.xlu0 %v445, 64
  %v448 = vpop.permute.xlu0 %447
  %v450 = vadd.f32 %v444, %v448
  %v451 = vtanh.pop %v450
  %v452 = vmul.f32 %v439, %v451
  %v454 = vrot.slane %v452, 2
  %455 = vrot.lane.b32.xlu0 %v454, 64
  %v456 = vpop.permute.xlu0 %455
  %v457 = vsel %vm135, %v456, 0
  %459 = vmatprep.subr.mxu0 0.0
  %460 = vmatpush1.msra.mxu0 0.0
  %461 = vmatprep.subr.mxu0 0.0
  %462 = vmatpush1.msra.mxu0 0.0
  %463 = vmatprep.subr.mxu0 0.0
  %464 = vmatpush1.msra.mxu0 0.0
  %465 = vmatprep.subr.mxu0 0.0
  %466 = vmatpush1.msra.mxu0 0.0
  %467 = vmatprep.subr.mxu0 0.0
  %468 = vmatpush1.msra.mxu0 0.0
  %469 = vmatprep.subr.mxu0 0.0
  %470 = vmatpush1.msra.mxu0 0.0
  %471 = vmatprep.subr.mxu0 0.0
  %472 = vmatpush1.msra.mxu0 0.0
  %473 = vmatprep.subr.mxu0 0.0
  %474 = vmatpush1.msra.mxu0 0.0
  %475 = vmatprep.subr.mxu0 %v134
  %476 = vmatpush1.msra.mxu0 %v133
  %477 = vmatprep.subr.mxu0 %v132
  %478 = vmatpush1.msra.mxu0 %v131
  %479 = vmatprep.subr.mxu0 %v130
  %480 = vmatpush1.msra.mxu0 %v129
  %481 = vmatprep.subr.mxu0 %v128
  %482 = vmatpush1.msra.mxu0 %v127
  %483 = vmatprep.subr.mxu0 %v126
  %484 = vmatpush1.msra.mxu0 %v125
  %485 = vmatprep.subr.mxu0 %v124
  %486 = vmatpush1.msra.mxu0 %v123
  %487 = vmatprep.subr.mxu0 %v122
  %488 = vmatpush1.msra.mxu0 %v121
  %489 = vmatprep.subr.mxu0 %v120
  %490 = vmatpush1.msra.mxu0 %v119
  %491 = vmatprep.subr.mxu0 0.0
  %492 = vmatpush2.msra.mxu0 0.0
  %493 = vmatprep.subr.mxu0 0.0
  %494 = vmatpush2.msra.mxu0 0.0
  %495 = vmatprep.subr.mxu0 0.0
  %496 = vmatpush2.msra.mxu0 0.0
  %497 = vmatprep.subr.mxu0 0.0
  %498 = vmatpush2.msra.mxu0 0.0
  %499 = vmatprep.subr.mxu0 0.0
  %500 = vmatpush2.msra.mxu0 0.0
  %501 = vmatprep.subr.mxu0 0.0
  %502 = vmatpush2.msra.mxu0 0.0
  %503 = vmatprep.subr.mxu0 0.0
  %504 = vmatpush2.msra.mxu0 0.0
  %505 = vmatprep.subr.mxu0 0.0
  %506 = vmatpush2.msra.mxu0 0.0
  %507 = vmatprep.subr.mxu0 0.0
  %508 = vmatpush2.msra.mxu0 0.0
  %509 = vmatprep.subr.mxu0 0.0
  %510 = vmatpush2.msra.mxu0 0.0
  %511 = vmatprep.subr.mxu0 0.0
  %512 = vmatpush2.msra.mxu0 0.0
  %513 = vmatprep.subr.mxu0 0.0
  %514 = vmatpush2.msra.mxu0 0.0
  %515 = vmatprep.subr.mxu0 0.0
  %516 = vmatpush2.msra.mxu0 0.0
  %517 = vmatprep.subr.mxu0 0.0
  %518 = vmatpush2.msra.mxu0 0.0
  %519 = vmatprep.subr.mxu0 0.0
  %520 = vmatpush2.msra.mxu0 0.0
  %521 = vmatprep.subr.mxu0 0.0
  %522 = vmatpush2.msra.mxu0 0.0
  %523 = vmatprep.mubr.f32.mxu0 0.0
  %524 = vmatmul.mubr.f32.gmra.mxu0 %v457
  %v525 = vpop.f32.mrf.mxu0
  %v526 = vadd.f32 0.0, %v525
  %v527 = vpop.f32.mrf.mxu0
  %v528 = vadd.f32 0.0, %v527
  %529 = vdwg.mxu0
  %v532 = vrot.slane %v526, 5
  %v533 = vrot.slane %v528, 5
  %v536 = vadd.f32 %v115, %v532
  %v537 = vadd.f32 %v117, %v533
  %v538 = vxor.u32 %v536, 2147483648
  %v539 = vxor.u32 %v537, 2147483648
  %v540 = vmul.f32 %v538, 1.442695
  %v541 = vpow.pop %v540
  %v542 = vmul.f32 %v539, 1.442695
  %v543 = vpow.pop %v542
  %v544 = vadd.f32 %v541, 1.0
  %v545 = vadd.f32 %v543, 1.0
  %v546 = vrcp.pop %v544
  %v547 = vmul.f32 1.0, %v546
  %v548 = vrcp.pop %v545
  %v549 = vmul.f32 1.0, %v548
  %v550 = vtanh.pop %v537
  %v552 = vrot.slane %v450, 7
  %v554 = vmul.f32 %v547, %v552
  %v555 = vmul.f32 %v547, %v550
  %557 = vrot.lane.b32.xlu0 %v555, 64
  %v558 = vpop.permute.xlu0 %557
  %v560 = vadd.f32 %v554, %v558
  %v561 = vtanh.pop %v560
  %v562 = vmul.f32 %v549, %v561
  %v564 = vrot.slane %v562, 3
  %565 = vrot.lane.b32.xlu0 %v564, 64
  %v566 = vpop.permute.xlu0 %565
  %v567 = vsel %vm135, %v566, 0
  %569 = vmatprep.subr.mxu0 0.0
  %570 = vmatpush1.msra.mxu0 0.0
  %571 = vmatprep.subr.mxu0 0.0
  %572 = vmatpush1.msra.mxu0 0.0
  %573 = vmatprep.subr.mxu0 0.0
  %574 = vmatpush1.msra.mxu0 0.0
  %575 = vmatprep.subr.mxu0 0.0
  %576 = vmatpush1.msra.mxu0 0.0
  %577 = vmatprep.subr.mxu0 0.0
  %578 = vmatpush1.msra.mxu0 0.0
  %579 = vmatprep.subr.mxu0 0.0
  %580 = vmatpush1.msra.mxu0 0.0
  %581 = vmatprep.subr.mxu0 0.0
  %582 = vmatpush1.msra.mxu0 0.0
  %583 = vmatprep.subr.mxu0 0.0
  %584 = vmatpush1.msra.mxu0 0.0
  %585 = vmatprep.subr.mxu0 %v134
  %586 = vmatpush1.msra.mxu0 %v133
  %587 = vmatprep.subr.mxu0 %v132
  %588 = vmatpush1.msra.mxu0 %v131
  %589 = vmatprep.subr.mxu0 %v130
  %590 = vmatpush1.msra.mxu0 %v129
  %591 = vmatprep.subr.mxu0 %v128
  %592 = vmatpush1.msra.mxu0 %v127
  %593 = vmatprep.subr.mxu0 %v126
  %594 = vmatpush1.msra.mxu0 %v125
  %595 = vmatprep.subr.mxu0 %v124
  %596 = vmatpush1.msra.mxu0 %v123
  %597 = vmatprep.subr.mxu0 %v122
  %598 = vmatpush1.msra.mxu0 %v121
  %599 = vmatprep.subr.mxu0 %v120
  %600 = vmatpush1.msra.mxu0 %v119
  %601 = vmatprep.subr.mxu0 0.0
  %602 = vmatpush2.msra.mxu0 0.0
  %603 = vmatprep.subr.mxu0 0.0
  %604 = vmatpush2.msra.mxu0 0.0
  %605 = vmatprep.subr.mxu0 0.0
  %606 = vmatpush2.msra.mxu0 0.0
  %607 = vmatprep.subr.mxu0 0.0
  %608 = vmatpush2.msra.mxu0 0.0
  %609 = vmatprep.subr.mxu0 0.0
  %610 = vmatpush2.msra.mxu0 0.0
  %611 = vmatprep.subr.mxu0 0.0
  %612 = vmatpush2.msra.mxu0 0.0
  %613 = vmatprep.subr.mxu0 0.0
  %614 = vmatpush2.msra.mxu0 0.0
  %615 = vmatprep.subr.mxu0 0.0
  %616 = vmatpush2.msra.mxu0 0.0
  %617 = vmatprep.subr.mxu0 0.0
  %618 = vmatpush2.msra.mxu0 0.0
  %619 = vmatprep.subr.mxu0 0.0
  %620 = vmatpush2.msra.mxu0 0.0
  %621 = vmatprep.subr.mxu0 0.0
  %622 = vmatpush2.msra.mxu0 0.0
  %623 = vmatprep.subr.mxu0 0.0
  %624 = vmatpush2.msra.mxu0 0.0
  %625 = vmatprep.subr.mxu0 0.0
  %626 = vmatpush2.msra.mxu0 0.0
  %627 = vmatprep.subr.mxu0 0.0
  %628 = vmatpush2.msra.mxu0 0.0
  %629 = vmatprep.subr.mxu0 0.0
  %630 = vmatpush2.msra.mxu0 0.0
  %631 = vmatprep.subr.mxu0 0.0
  %632 = vmatpush2.msra.mxu0 0.0
  %633 = vmatprep.mubr.f32.mxu0 0.0
  %634 = vmatmul.mubr.f32.gmra.mxu0 %v567
  %v635 = vpop.f32.mrf.mxu0
  %v636 = vadd.f32 0.0, %v635
  %v637 = vpop.f32.mrf.mxu0
  %v638 = vadd.f32 0.0, %v637
  %639 = vdwg.mxu0
  %v642 = vrot.slane %v636, 4
  %v643 = vrot.slane %v638, 4
  %v646 = vadd.f32 %v115, %v642
  %v647 = vadd.f32 %v117, %v643
  %v648 = vxor.u32 %v646, 2147483648
  %v649 = vxor.u32 %v647, 2147483648
  %v650 = vmul.f32 %v648, 1.442695
  %v651 = vpow.pop %v650
  %v652 = vmul.f32 %v649, 1.442695
  %v653 = vpow.pop %v652
  %v654 = vadd.f32 %v651, 1.0
  %v655 = vadd.f32 %v653, 1.0
  %v656 = vrcp.pop %v654
  %v657 = vmul.f32 1.0, %v656
  %v658 = vrcp.pop %v655
  %v659 = vmul.f32 1.0, %v658
  %v660 = vtanh.pop %v647
  %v662 = vrot.slane %v560, 7
  %v664 = vmul.f32 %v657, %v662
  %v665 = vmul.f32 %v657, %v660
  %667 = vrot.lane.b32.xlu0 %v665, 64
  %v668 = vpop.permute.xlu0 %667
  %v670 = vadd.f32 %v664, %v668
  %v671 = vtanh.pop %v670
  %v672 = vmul.f32 %v659, %v671
  %v674 = vrot.slane %v672, 4
  %675 = vrot.lane.b32.xlu0 %v674, 64
  %v676 = vpop.permute.xlu0 %675
  %v677 = vsel %vm135, %v676, 0
  %679 = vmatprep.subr.mxu0 0.0
  %680 = vmatpush1.msra.mxu0 0.0
  %681 = vmatprep.subr.mxu0 0.0
  %682 = vmatpush1.msra.mxu0 0.0
  %683 = vmatprep.subr.mxu0 0.0
  %684 = vmatpush1.msra.mxu0 0.0
  %685 = vmatprep.subr.mxu0 0.0
  %686 = vmatpush1.msra.mxu0 0.0
  %687 = vmatprep.subr.mxu0 0.0
  %688 = vmatpush1.msra.mxu0 0.0
  %689 = vmatprep.subr.mxu0 0.0
  %690 = vmatpush1.msra.mxu0 0.0
  %691 = vmatprep.subr.mxu0 0.0
  %692 = vmatpush1.msra.mxu0 0.0
  %693 = vmatprep.subr.mxu0 0.0
  %694 = vmatpush1.msra.mxu0 0.0
  %695 = vmatprep.subr.mxu0 %v134
  %696 = vmatpush1.msra.mxu0 %v133
  %697 = vmatprep.subr.mxu0 %v132
  %698 = vmatpush1.msra.mxu0 %v131
  %699 = vmatprep.subr.mxu0 %v130
  %700 = vmatpush1.msra.mxu0 %v129
  %701 = vmatprep.subr.mxu0 %v128
  %702 = vmatpush1.msra.mxu0 %v127
  %703 = vmatprep.subr.mxu0 %v126
  %704 = vmatpush1.msra.mxu0 %v125
  %705 = vmatprep.subr.mxu0 %v124
  %706 = vmatpush1.msra.mxu0 %v123
  %707 = vmatprep.subr.mxu0 %v122
  %708 = vmatpush1.msra.mxu0 %v121
  %709 = vmatprep.subr.mxu0 %v120
  %710 = vmatpush1.msra.mxu0 %v119
  %711 = vmatprep.subr.mxu0 0.0
  %712 = vmatpush2.msra.mxu0 0.0
  %713 = vmatprep.subr.mxu0 0.0
  %714 = vmatpush2.msra.mxu0 0.0
  %715 = vmatprep.subr.mxu0 0.0
  %716 = vmatpush2.msra.mxu0 0.0
  %717 = vmatprep.subr.mxu0 0.0
  %718 = vmatpush2.msra.mxu0 0.0
  %719 = vmatprep.subr.mxu0 0.0
  %720 = vmatpush2.msra.mxu0 0.0
  %721 = vmatprep.subr.mxu0 0.0
  %722 = vmatpush2.msra.mxu0 0.0
  %723 = vmatprep.subr.mxu0 0.0
  %724 = vmatpush2.msra.mxu0 0.0
  %725 = vmatprep.subr.mxu0 0.0
  %726 = vmatpush2.msra.mxu0 0.0
  %727 = vmatprep.subr.mxu0 0.0
  %728 = vmatpush2.msra.mxu0 0.0
  %729 = vmatprep.subr.mxu0 0.0
  %730 = vmatpush2.msra.mxu0 0.0
  %731 = vmatprep.subr.mxu0 0.0
  %732 = vmatpush2.msra.mxu0 0.0
  %733 = vmatprep.subr.mxu0 0.0
  %734 = vmatpush2.msra.mxu0 0.0
  %735 = vmatprep.subr.mxu0 0.0
  %736 = vmatpush2.msra.mxu0 0.0
  %737 = vmatprep.subr.mxu0 0.0
  %738 = vmatpush2.msra.mxu0 0.0
  %739 = vmatprep.subr.mxu0 0.0
  %740 = vmatpush2.msra.mxu0 0.0
  %741 = vmatprep.subr.mxu0 0.0
  %742 = vmatpush2.msra.mxu0 0.0
  %743 = vmatprep.mubr.f32.mxu0 0.0
  %744 = vmatmul.mubr.f32.gmra.mxu0 %v677
  %v745 = vpop.f32.mrf.mxu0
  %v746 = vadd.f32 0.0, %v745
  %v747 = vpop.f32.mrf.mxu0
  %v748 = vadd.f32 0.0, %v747
  %749 = vdwg.mxu0
  %v752 = vrot.slane %v746, 3
  %v753 = vrot.slane %v748, 3
  %v756 = vadd.f32 %v115, %v752
  %v757 = vadd.f32 %v117, %v753
  %v758 = vxor.u32 %v756, 2147483648
  %v759 = vxor.u32 %v757, 2147483648
  %v760 = vmul.f32 %v758, 1.442695
  %v761 = vpow.pop %v760
  %v762 = vmul.f32 %v759, 1.442695
  %v763 = vpow.pop %v762
  %v764 = vadd.f32 %v761, 1.0
  %v765 = vadd.f32 %v763, 1.0
  %v766 = vrcp.pop %v764
  %v767 = vmul.f32 1.0, %v766
  %v768 = vrcp.pop %v765
  %v769 = vmul.f32 1.0, %v768
  %v770 = vtanh.pop %v757
  %v772 = vrot.slane %v670, 7
  %v774 = vmul.f32 %v767, %v772
  %v775 = vmul.f32 %v767, %v770
  %777 = vrot.lane.b32.xlu0 %v775, 64
  %v778 = vpop.permute.xlu0 %777
  %v780 = vadd.f32 %v774, %v778
  %v781 = vtanh.pop %v780
  %v782 = vmul.f32 %v769, %v781
  %v785 = vrot.slane %v782, 5
  %786 = vrot.lane.b32.xlu0 %v785, 64
  %v787 = vpop.permute.xlu0 %786
  %v789 = vsel %vm44, %v236, %v787
  %790 = vrot.lane.b32.xlu0 %v342, 64
  %v791 = vpop.permute.xlu0 %790
  %v793 = vrot.slane %v672, 3
  %794 = vrot.lane.b32.xlu0 %v793, 64
  %v795 = vpop.permute.xlu0 %794
  %v797 = vsel %vm44, %v791, %v795
  %798 = vrot.lane.b32.xlu0 %v452, 64
  %v799 = vpop.permute.xlu0 %798
  %v801 = vrot.slane %v562, 1
  %802 = vrot.lane.b32.xlu0 %v801, 64
  %v803 = vpop.permute.xlu0 %802
  %v805 = vsel %vm44, %v799, %v803
  %806 = vrot.lane.b32.xlu0 %v562, 64
  %v807 = vpop.permute.xlu0 %806
  %v809 = vrot.slane %v452, 7
  %810 = vrot.lane.b32.xlu0 %v809, 64
  %v811 = vpop.permute.xlu0 %810
  %v813 = vsel %vm44, %v807, %v811
  %814 = vrot.lane.b32.xlu0 %v672, 64
  %v815 = vpop.permute.xlu0 %814
  %v817 = vrot.slane %v342, 5
  %818 = vrot.lane.b32.xlu0 %v817, 64
  %v819 = vpop.permute.xlu0 %818
  %v821 = vsel %vm44, %v815, %v819
  %822 = vrot.lane.b32.xlu0 %v782, 64
  %v823 = vpop.permute.xlu0 %822
  %v825 = vrot.slane %v233, 3
  %826 = vrot.lane.b32.xlu0 %v825, 64
  %v827 = vpop.permute.xlu0 %826
  %v829 = vsel %vm44, %v823, %v827
  %vm830 = vcmask 1040384
  %v831 = vsel %vm830, %v789, %v797
  %vm832 = vcmask 1041408
  %v833 = vsel %vm832, %v831, %v805
  %vm834 = vcmask 1042432
  %v835 = vsel %vm834, %v833, %v813
  %vm836 = vcmask 1043456
  %v837 = vsel %vm836, %v835, %v821
  %vm838 = vcmask 1044480
  %v839 = vsel %vm838, %v837, %v829
  %vm840 = vcmask 1045504
  %v841 = vsel %vm840, %v839, 0.0
  %v842 = vld [vmem:[%s4] sm:$0xff]
  %v843 = vld [vmem:[%s4 + $0x8] sm:$0xff]
  %v844 = vld [vmem:[%s4 + $0x10] sm:$0xff]
  %v845 = vld [vmem:[%s4 + $0x18] sm:$0xff]
  %v846 = vld [vmem:[%s4 + $0x20] sm:$0xff]
  %v847 = vld [vmem:[%s4 + $0x28] sm:$0xff]
  %v848 = vld [vmem:[%s4 + $0x30] sm:$0xff]
  %v849 = vld [vmem:[%s4 + $0x38] sm:$0xff]
  %v850 = vld [vmem:[%s5] sm:$0x1]
  %v852 = vlaneseq
  %v853 = vshrl.u32 %v852, 7
  %v854 = vsub.s32 0, %v853
  %v855 = vrot.slane %v850, %v854
  %v858 = vsel %vm135, %v841, 0
  %860 = vmatprep.subr.mxu0 0.0
  %861 = vmatpush1.msra.mxu0 0.0
  %862 = vmatprep.subr.mxu0 0.0
  %863 = vmatpush1.msra.mxu0 0.0
  %864 = vmatprep.subr.mxu0 0.0
  %865 = vmatpush1.msra.mxu0 0.0
  %866 = vmatprep.subr.mxu0 0.0
  %867 = vmatpush1.msra.mxu0 0.0
  %868 = vmatprep.subr.mxu0 0.0
  %869 = vmatpush1.msra.mxu0 0.0
  %870 = vmatprep.subr.mxu0 0.0
  %871 = vmatpush1.msra.mxu0 0.0
  %872 = vmatprep.subr.mxu0 0.0
  %873 = vmatpush1.msra.mxu0 0.0
  %874 = vmatprep.subr.mxu0 0.0
  %875 = vmatpush1.msra.mxu0 0.0
  %876 = vmatprep.subr.mxu0 0.0
  %877 = vmatpush1.msra.mxu0 %v849
  %878 = vmatprep.subr.mxu0 0.0
  %879 = vmatpush1.msra.mxu0 %v848
  %880 = vmatprep.subr.mxu0 0.0
  %881 = vmatpush1.msra.mxu0 %v847
  %882 = vmatprep.subr.mxu0 0.0
  %883 = vmatpush1.msra.mxu0 %v846
  %884 = vmatprep.subr.mxu0 0.0
  %885 = vmatpush1.msra.mxu0 %v845
  %886 = vmatprep.subr.mxu0 0.0
  %887 = vmatpush1.msra.mxu0 %v844
  %888 = vmatprep.subr.mxu0 0.0
  %889 = vmatpush1.msra.mxu0 %v843
  %890 = vmatprep.subr.mxu0 0.0
  %891 = vmatpush1.msra.mxu0 %v842
  %892 = vmatprep.subr.mxu0 0.0
  %893 = vmatpush2.msra.mxu0 0.0
  %894 = vmatprep.subr.mxu0 0.0
  %895 = vmatpush2.msra.mxu0 0.0
  %896 = vmatprep.subr.mxu0 0.0
  %897 = vmatpush2.msra.mxu0 0.0
  %898 = vmatprep.subr.mxu0 0.0
  %899 = vmatpush2.msra.mxu0 0.0
  %900 = vmatprep.subr.mxu0 0.0
  %901 = vmatpush2.msra.mxu0 0.0
  %902 = vmatprep.subr.mxu0 0.0
  %903 = vmatpush2.msra.mxu0 0.0
  %904 = vmatprep.subr.mxu0 0.0
  %905 = vmatpush2.msra.mxu0 0.0
  %906 = vmatprep.subr.mxu0 0.0
  %907 = vmatpush2.msra.mxu0 0.0
  %908 = vmatprep.subr.mxu0 0.0
  %909 = vmatpush2.msra.mxu0 0.0
  %910 = vmatprep.subr.mxu0 0.0
  %911 = vmatpush2.msra.mxu0 0.0
  %912 = vmatprep.subr.mxu0 0.0
  %913 = vmatpush2.msra.mxu0 0.0
  %914 = vmatprep.subr.mxu0 0.0
  %915 = vmatpush2.msra.mxu0 0.0
  %916 = vmatprep.subr.mxu0 0.0
  %917 = vmatpush2.msra.mxu0 0.0
  %918 = vmatprep.subr.mxu0 0.0
  %919 = vmatpush2.msra.mxu0 0.0
  %920 = vmatprep.subr.mxu0 0.0
  %921 = vmatpush2.msra.mxu0 0.0
  %922 = vmatprep.subr.mxu0 0.0
  %923 = vmatpush2.msra.mxu0 0.0
  %924 = vmatprep.mubr.f32.mxu0 0.0
  %925 = vmatmul.mubr.f32.gmra.mxu0 %v858
  %v926 = vpop.f32.mrf.mxu0
  %v927 = vadd.f32 %v855, %v926
  %v928 = vpop.f32.mrf.mxu0
  %929 = vdwg.mxu0
  %v930 = vxor.u32 %v927, 2147483648
  %v931 = vmul.f32 %v930, 1.442695
  %v932 = vpow.pop %v931
  %v933 = vadd.f32 %v932, 1.0
  %v934 = vrcp.pop %v933
  %v935 = vmul.f32 1.0, %v934
  %936 = vst [vmem:[%s6] sm:$0xff] %v935
  // Predicated region
  $region26: #{classification_forward.1} parent=0 // pred_check
    _
  $region27: #{classification_forward.1} parent=0 // pred_check_branch
    %938 = sbr.rel (0) target = $region29
  $region28: #{classification_forward.1} parent=0 // pred_region
    _
  $region29: #{classification_forward.1} parent=0 // pred_fallthru
    _
  // Predicated region
  $region30: #{classification_forward.1} parent=0 // pred_check
    _
  $region31: #{classification_forward.1} parent=0 // pred_check_branch
    %940 = sbr.rel (0) target = $region33
  $region32: #{classification_forward.1} parent=0 // pred_region
    _
  $region33: #{classification_forward.1} parent=0 // pred_fallthru
    _

</llo_original>
